<compile_context>
chip_gen: v5e
topology: v5e:2x2
jax: 0.10.0
libtpu: 0.0.40
codegen_flags: <defaults>
</compile_context>

<pallas_src>
import functools

import jax
import jax.numpy as jnp
from jax.experimental import pallas as pl
from jax.experimental.pallas import tpu as pltpu


def _round_up(x: int, m: int) -> int:
    return -(-x // m) * m


def _sigmoid(x):
    # One EUP tanh per sigmoid, no divide (cheaper than 1/(1+exp(-x))).
    return 0.5 * (jnp.tanh(0.5 * x) + 1.0)


def _tree_lstm_kernel(hl_ref, hr_ref, cl_ref, cr_ref, wl_ref, wr_ref, b_ref,
                      h_ref, c_ref):
    Hp = cl_ref.shape[1]

    # Two MXU matmuls (one per child), f32 accumulation, fused bias add.
    proj = (jnp.dot(hl_ref[...], wl_ref[...], preferred_element_type=jnp.float32)
            + jnp.dot(hr_ref[...], wr_ref[...], preferred_element_type=jnp.float32)
            + b_ref[...])

    # Gate blocks are lane-aligned (Hp is a multiple of 128) -> free slices.
    # Build c by accumulation so gate tiles are consumed immediately
    # (low vreg/VMEM liveness between the matmul and the gate math).
    c = _sigmoid(proj[:, 0 * Hp:1 * Hp]) * jnp.tanh(proj[:, 3 * Hp:4 * Hp])
    c = c + _sigmoid(proj[:, 1 * Hp:2 * Hp]) * cl_ref[...]
    c = c + _sigmoid(proj[:, 2 * Hp:3 * Hp]) * cr_ref[...]
    h = _sigmoid(proj[:, 4 * Hp:5 * Hp]) * jnp.tanh(c)

    c_ref[...] = c.astype(c_ref.dtype)
    h_ref[...] = h.astype(h_ref.dtype)


@functools.partial(jax.jit, static_argnames=("block_b", "mxu_dtype"))
def tree_lstm_cell_forward(h_l, c_l, h_r, c_r, weight, bias, *,
                           block_b=256, mxu_dtype=jnp.bfloat16):
    """TreeLSTMCell forward.

    h_l, c_l, h_r, c_r : (B, H) f32
    weight             : (5H, 2H) f32  (torch nn.Linear layout: out, in)
    bias               : (5H,)    f32
    Returns (h, c), each (B, H) f32.
    """
    B, H = h_l.shape
    Hp = _round_up(max(H, 128), 128)          # lane-aligned gate width
    f32 = jnp.float32

    # ---- batch tiling: >=2 grid steps when possible (v7x megacore), tiles a
    # multiple of 8 rows, padding at most 8*(n_tiles - 1) rows. ---------------
    B8 = _round_up(max(B, 8), 8)
    max_tiles = B8 // 8
    want_tiles = max(2, -(-B8 // block_b))
    n_tiles = min(want_tiles, max_tiles)
    TB = _round_up(-(-B8 // n_tiles), 8)
    n_tiles = -(-B8 // TB)
    Bp = n_tiles * TB

    # ---- wrapper-side layout plumbing (fast path: no copies when aligned) ---
    def _pad2d(x, dtype):
        x = x.astype(dtype)
        pr, pc = Bp - x.shape[0], Hp - x.shape[1]
        if pr or pc:
            x = jnp.pad(x, ((0, pr), (0, pc)))
        return x

    hl_p = _pad2d(h_l, mxu_dtype)
    hr_p = _pad2d(h_r, mxu_dtype)
    cl_p = _pad2d(c_l, f32)
    cr_p = _pad2d(c_r, f32)

    # Torch weight (5H, 2H) -> W^T (2H, 5H); split per child. Gate g already
    # occupies columns [g*H:(g+1)*H] of W^T, so when H % 128 == 0 the weights
    # pass straight through with no repacking.
    w_t = weight.T.astype(f32)
    w_left, w_right = w_t[:H, :], w_t[H:, :]          # each (H, 5H)
    if Hp != H:
        def _pad_w(w):
            w = w.reshape(H, 5, H)
            w = jnp.pad(w, ((0, Hp - H), (0, 0), (0, Hp - H)))
            return w.reshape(Hp, 5 * Hp)
        w_left, w_right = _pad_w(w_left), _pad_w(w_right)
        b_p = jnp.pad(bias.astype(f32).reshape(5, H),
                      ((0, 0), (0, Hp - H))).reshape(1, 5 * Hp)
    else:
        b_p = bias.astype(f32).reshape(1, 5 * H)
    w_left = w_left.astype(mxu_dtype)
    w_right = w_right.astype(mxu_dtype)
    # -------------------------------------------------------------------------

    # VMEM budget: weights single-buffered (Buffered(1)), batch tiles double-
    # buffered, plus the (TB, 5Hp) proj temporary; 30% headroom, 48 MiB cap
    # (safe on v7x's 64 MiB physical VMEM).
    # NOTE: for very large H (>~1k) a second grid axis over the 5 gates would
    # be needed to keep the resident weight small; not required at these sizes.
    itm = jnp.dtype(mxu_dtype).itemsize
    vmem_need = (2 * Hp * 5 * Hp * itm            # W_left + W_right (1 buf each)
                 + 5 * Hp * 4                     # bias
                 + 2 * 2 * TB * Hp * itm          # h_l, h_r tiles (2 bufs)
                 + 2 * 2 * TB * Hp * 4            # c_l, c_r tiles (2 bufs)
                 + 2 * 2 * TB * Hp * 4            # h, c output tiles (2 bufs)
                 + TB * 5 * Hp * 4)               # proj temporary
    vmem_limit = int(min(max(vmem_need * 1.3, 16 * 1024 * 1024),
                         48 * 1024 * 1024))

    h_pad, c_pad = pl.pallas_call(
        _tree_lstm_kernel,
        out_shape=(jax.ShapeDtypeStruct((Bp, Hp), f32),
                   jax.ShapeDtypeStruct((Bp, Hp), f32)),
        grid_spec=pltpu.PrefetchScalarGridSpec(
            num_scalar_prefetch=0,
            grid=(n_tiles,),
            in_specs=[
                pl.BlockSpec((TB, Hp), lambda b: (b, 0)),          # h_l
                pl.BlockSpec((TB, Hp), lambda b: (b, 0)),          # h_r
                pl.BlockSpec((TB, Hp), lambda b: (b, 0)),          # c_l
                pl.BlockSpec((TB, Hp), lambda b: (b, 0)),          # c_r
                pl.BlockSpec((Hp, 5 * Hp), lambda b: (0, 0),       # W_left
                             pipeline_mode=pl.Buffered(1)),
                pl.BlockSpec((Hp, 5 * Hp), lambda b: (0, 0),       # W_right
                             pipeline_mode=pl.Buffered(1)),
                pl.BlockSpec((1, 5 * Hp), lambda b: (0, 0),        # bias
                             pipeline_mode=pl.Buffered(1)),
            ],
            out_specs=(
                pl.BlockSpec((TB, Hp), lambda b: (b, 0)),          # h
                pl.BlockSpec((TB, Hp), lambda b: (b, 0)),          # c
            ),
        ),
        compiler_params=pltpu.CompilerParams(
            dimension_semantics=("parallel",),   # batch tiles -> both TCs on v7x
            vmem_limit_bytes=vmem_limit,
        ),
    )(hl_p, hr_p, cl_p, cr_p, w_left, w_right, b_p)

    if Bp != B or Hp != H:
        return h_pad[:B, :H], c_pad[:B, :H]
    return h_pad, c_pad


def _reference(h_l, c_l, h_r, c_r, weight, bias):
    children = jnp.concatenate([h_l, h_r], axis=1)
    proj = children @ weight.T + bias
    i, f_l, f_r, g, o = jnp.split(proj, 5, axis=-1)
    sig = jax.nn.sigmoid
    c = sig(i) * jnp.tanh(g) + sig(f_l) * c_l + sig(f_r) * c_r
    h = sig(o) * jnp.tanh(c)
    return h, c


if __name__ == "__main__":
    # Small, deterministic configuration: batch=2, hidden=32.
    B, H = 2, 32
    stdv = 1.0 / (H ** 0.5)

    key = jax.random.PRNGKey(0)
    k_hl, k_cl, k_hr, k_cr, k_w, k_b = jax.random.split(key, 6)

    h_l = jax.random.normal(k_hl, (B, H), dtype=jnp.float32)
    c_l = jax.random.normal(k_cl, (B, H), dtype=jnp.float32)
    h_r = jax.random.normal(k_hr, (B, H), dtype=jnp.float32)
    c_r = jax.random.normal(k_cr, (B, H), dtype=jnp.float32)
    # PyTorch default init: uniform(-stdv, stdv).
    weight = jax.random.uniform(k_w, (5 * H, 2 * H), dtype=jnp.float32,
                                minval=-stdv, maxval=stdv)
    bias = jax.random.uniform(k_b, (5 * H,), dtype=jnp.float32,
                              minval=-stdv, maxval=stdv)

    # TODO(synk): dropout_layer (p=0.25) and the `mask` argument exist on the
    # module but are never used in forward(), so they are intentionally omitted.

    h_ref, c_ref = _reference(h_l, c_l, h_r, c_r, weight, bias)

    # Default (bf16 MXU inputs, f32 accumulation / gate math).
    h, c = tree_lstm_cell_forward(h_l, c_l, h_r, c_r, weight, bias)
    h, c = jax.block_until_ready((h, c))
    assert h.shape == (B, H) and c.shape == (B, H)
    assert jnp.allclose(h, h_ref, atol=2e-2, rtol=2e-2)
    assert jnp.allclose(c, c_ref, atol=2e-2, rtol=2e-2)

    # Full-precision MXU path: tight numerics check.
    h32, c32 = tree_lstm_cell_forward(h_l, c_l, h_r, c_r, weight, bias,
                                      mxu_dtype=jnp.float32)
    h32, c32 = jax.block_until_ready((h32, c32))
    assert jnp.allclose(h32, h_ref, atol=3e-5, rtol=1e-5)
    assert jnp.allclose(c32, c_ref, atol=3e-5, rtol=1e-5)

    print("KERNEL_OK")
</pallas_src>

<mosaic_0001>
module attributes {stable_mosaic.version = 11 : i64} {
  func.func @_tree_lstm_kernel(%arg0: i32, %arg1: memref<8x128xbf16, #tpu.memory_space<vmem>>, %arg2: memref<8x128xbf16, #tpu.memory_space<vmem>>, %arg3: memref<8x128xf32, #tpu.memory_space<vmem>>, %arg4: memref<8x128xf32, #tpu.memory_space<vmem>>, %arg5: memref<128x640xbf16, #tpu.memory_space<vmem>>, %arg6: memref<128x640xbf16, #tpu.memory_space<vmem>>, %arg7: memref<1x640xf32, #tpu.memory_space<vmem>>, %arg8: memref<8x128xf32, #tpu.memory_space<vmem>>, %arg9: memref<8x128xf32, #tpu.memory_space<vmem>>) attributes {dimension_semantics = [#tpu.dimension_semantics<parallel>], iteration_bounds = array<i64: 1>, scalar_prefetch = 0 : i64, scratch_operands = 0 : i64, tpu.core_type = #tpu.core_type<tc>, window_params = [{transform_indices = @transform_0, window_bounds = array<i64: 8, 128>}, {transform_indices = @transform_1, window_bounds = array<i64: 8, 128>}, {transform_indices = @transform_2, window_bounds = array<i64: 8, 128>}, {transform_indices = @transform_3, window_bounds = array<i64: 8, 128>}, {pipeline_mode = #tpu.pipeline_mode<synchronous>, transform_indices = @transform_4, window_bounds = array<i64: 128, 640>}, {pipeline_mode = #tpu.pipeline_mode<synchronous>, transform_indices = @transform_5, window_bounds = array<i64: 128, 640>}, {pipeline_mode = #tpu.pipeline_mode<synchronous>, transform_indices = @transform_6, window_bounds = array<i64: 1, 640>}, {transform_indices = @transform_7, window_bounds = array<i64: 8, 128>}, {transform_indices = @transform_8, window_bounds = array<i64: 8, 128>}]} {
    %c0 = arith.constant 0 : index
    %c0_0 = arith.constant 0 : index
    %0 = vector.load %arg1[%c0, %c0_0] : memref<8x128xbf16, #tpu.memory_space<vmem>>, vector<8x128xbf16>
    %c0_1 = arith.constant 0 : index
    %c0_2 = arith.constant 0 : index
    %1 = vector.load %arg5[%c0_1, %c0_2] : memref<128x640xbf16, #tpu.memory_space<vmem>>, vector<128x640xbf16>
    %cst = arith.constant dense<0.000000e+00> : vector<8x640xf32>
    %2 = tpu.matmul %0, %1, %cst {dimension_numbers = #tpu.dot_dimension_numbers<[1], [0], [0], [1], [0, 0, 1, 1], [], []>} : vector<8x128xbf16>, vector<128x640xbf16>, vector<8x640xf32> -> vector<8x640xf32>
    %c0_3 = arith.constant 0 : index
    %c0_4 = arith.constant 0 : index
    %3 = vector.load %arg2[%c0_3, %c0_4] : memref<8x128xbf16, #tpu.memory_space<vmem>>, vector<8x128xbf16>
    %c0_5 = arith.constant 0 : index
    %c0_6 = arith.constant 0 : index
    %4 = vector.load %arg6[%c0_5, %c0_6] : memref<128x640xbf16, #tpu.memory_space<vmem>>, vector<128x640xbf16>
    %cst_7 = arith.constant dense<0.000000e+00> : vector<8x640xf32>
    %5 = tpu.matmul %3, %4, %cst_7 {dimension_numbers = #tpu.dot_dimension_numbers<[1], [0], [0], [1], [0, 0, 1, 1], [], []>} : vector<8x128xbf16>, vector<128x640xbf16>, vector<8x640xf32> -> vector<8x640xf32>
    %6 = arith.addf %2, %5 : vector<8x640xf32>
    %c0_8 = arith.constant 0 : index
    %c0_9 = arith.constant 0 : index
    %7 = vector.load %arg7[%c0_8, %c0_9] : memref<1x640xf32, #tpu.memory_space<vmem>>, vector<1x640xf32>
    %8 = vector.broadcast %7 : vector<1x640xf32> to vector<8x640xf32>
    %9 = arith.addf %6, %8 : vector<8x640xf32>
    %10 = vector.extract_strided_slice %9 {offsets = [0, 0], sizes = [8, 128], strides = [1, 1]} : vector<8x640xf32> to vector<8x128xf32>
    %cst_10 = arith.constant 5.000000e-01 : f32
    %11 = vector.broadcast %cst_10 : f32 to vector<8x128xf32>
    %12 = arith.mulf %11, %10 : vector<8x128xf32>
    %13 = math.tanh %12 : vector<8x128xf32>
    %cst_11 = arith.constant 1.000000e+00 : f32
    %14 = vector.broadcast %cst_11 : f32 to vector<8x128xf32>
    %15 = arith.addf %13, %14 : vector<8x128xf32>
    %cst_12 = arith.constant 5.000000e-01 : f32
    %16 = vector.broadcast %cst_12 : f32 to vector<8x128xf32>
    %17 = arith.mulf %16, %15 : vector<8x128xf32>
    %18 = vector.extract_strided_slice %9 {offsets = [0, 384], sizes = [8, 128], strides = [1, 1]} : vector<8x640xf32> to vector<8x128xf32>
    %19 = math.tanh %18 : vector<8x128xf32>
    %20 = arith.mulf %17, %19 : vector<8x128xf32>
    %21 = vector.extract_strided_slice %9 {offsets = [0, 128], sizes = [8, 128], strides = [1, 1]} : vector<8x640xf32> to vector<8x128xf32>
    %cst_13 = arith.constant 5.000000e-01 : f32
    %22 = vector.broadcast %cst_13 : f32 to vector<8x128xf32>
    %23 = arith.mulf %22, %21 : vector<8x128xf32>
    %24 = math.tanh %23 : vector<8x128xf32>
    %cst_14 = arith.constant 1.000000e+00 : f32
    %25 = vector.broadcast %cst_14 : f32 to vector<8x128xf32>
    %26 = arith.addf %24, %25 : vector<8x128xf32>
    %cst_15 = arith.constant 5.000000e-01 : f32
    %27 = vector.broadcast %cst_15 : f32 to vector<8x128xf32>
    %28 = arith.mulf %27, %26 : vector<8x128xf32>
    %c0_16 = arith.constant 0 : index
    %c0_17 = arith.constant 0 : index
    %29 = vector.load %arg3[%c0_16, %c0_17] : memref<8x128xf32, #tpu.memory_space<vmem>>, vector<8x128xf32>
    %30 = arith.mulf %28, %29 : vector<8x128xf32>
    %31 = arith.addf %20, %30 : vector<8x128xf32>
    %32 = vector.extract_strided_slice %9 {offsets = [0, 256], sizes = [8, 128], strides = [1, 1]} : vector<8x640xf32> to vector<8x128xf32>
    %cst_18 = arith.constant 5.000000e-01 : f32
    %33 = vector.broadcast %cst_18 : f32 to vector<8x128xf32>
    %34 = arith.mulf %33, %32 : vector<8x128xf32>
    %35 = math.tanh %34 : vector<8x128xf32>
    %cst_19 = arith.constant 1.000000e+00 : f32
    %36 = vector.broadcast %cst_19 : f32 to vector<8x128xf32>
    %37 = arith.addf %35, %36 : vector<8x128xf32>
    %cst_20 = arith.constant 5.000000e-01 : f32
    %38 = vector.broadcast %cst_20 : f32 to vector<8x128xf32>
    %39 = arith.mulf %38, %37 : vector<8x128xf32>
    %c0_21 = arith.constant 0 : index
    %c0_22 = arith.constant 0 : index
    %40 = vector.load %arg4[%c0_21, %c0_22] : memref<8x128xf32, #tpu.memory_space<vmem>>, vector<8x128xf32>
    %41 = arith.mulf %39, %40 : vector<8x128xf32>
    %42 = arith.addf %31, %41 : vector<8x128xf32>
    %43 = vector.extract_strided_slice %9 {offsets = [0, 512], sizes = [8, 128], strides = [1, 1]} : vector<8x640xf32> to vector<8x128xf32>
    %cst_23 = arith.constant 5.000000e-01 : f32
    %44 = vector.broadcast %cst_23 : f32 to vector<8x128xf32>
    %45 = arith.mulf %44, %43 : vector<8x128xf32>
    %46 = math.tanh %45 : vector<8x128xf32>
    %cst_24 = arith.constant 1.000000e+00 : f32
    %47 = vector.broadcast %cst_24 : f32 to vector<8x128xf32>
    %48 = arith.addf %46, %47 : vector<8x128xf32>
    %cst_25 = arith.constant 5.000000e-01 : f32
    %49 = vector.broadcast %cst_25 : f32 to vector<8x128xf32>
    %50 = arith.mulf %49, %48 : vector<8x128xf32>
    %51 = math.tanh %42 : vector<8x128xf32>
    %52 = arith.mulf %50, %51 : vector<8x128xf32>
    %c0_26 = arith.constant 0 : index
    %c0_27 = arith.constant 0 : index
    %53 = vector.load %arg9[%c0_26, %c0_27] : memref<8x128xf32, #tpu.memory_space<vmem>>, vector<8x128xf32>
    tpu.vector_store %arg9[%c0_26, %c0_27], %42 {strides = array<i32>} : memref<8x128xf32, #tpu.memory_space<vmem>>, vector<8x128xf32>,
    %c0_28 = arith.constant 0 : index
    %c0_29 = arith.constant 0 : index
    %54 = vector.load %arg8[%c0_28, %c0_29] : memref<8x128xf32, #tpu.memory_space<vmem>>, vector<8x128xf32>
    tpu.vector_store %arg8[%c0_28, %c0_29], %52 {strides = array<i32>} : memref<8x128xf32, #tpu.memory_space<vmem>>, vector<8x128xf32>,
    return
  }
  func.func @transform_0(%arg0: i32) -> (i32, i32) {
    %c0_i32 = arith.constant 0 : i32
    %c0_i32_0 = arith.constant 0 : i32
    return %arg0, %c0_i32 : i32, i32
  }
  func.func @transform_1(%arg0: i32) -> (i32, i32) {
    %c0_i32 = arith.constant 0 : i32
    %c0_i32_0 = arith.constant 0 : i32
    return %arg0, %c0_i32 : i32, i32
  }
  func.func @transform_2(%arg0: i32) -> (i32, i32) {
    %c0_i32 = arith.constant 0 : i32
    %c0_i32_0 = arith.constant 0 : i32
    return %arg0, %c0_i32 : i32, i32
  }
  func.func @transform_3(%arg0: i32) -> (i32, i32) {
    %c0_i32 = arith.constant 0 : i32
    %c0_i32_0 = arith.constant 0 : i32
    return %arg0, %c0_i32 : i32, i32
  }
  func.func @transform_4(%arg0: i32) -> (i32, i32) {
    %c0_i32 = arith.constant 0 : i32
    %c0_i32_0 = arith.constant 0 : i32
    %c0_i32_1 = arith.constant 0 : i32
    return %c0_i32, %c0_i32_0 : i32, i32
  }
  func.func @transform_5(%arg0: i32) -> (i32, i32) {
    %c0_i32 = arith.constant 0 : i32
    %c0_i32_0 = arith.constant 0 : i32
    %c0_i32_1 = arith.constant 0 : i32
    return %c0_i32, %c0_i32_0 : i32, i32
  }
  func.func @transform_6(%arg0: i32) -> (i32, i32) {
    %c0_i32 = arith.constant 0 : i32
    %c0_i32_0 = arith.constant 0 : i32
    %c0_i32_1 = arith.constant 0 : i32
    return %c0_i32, %c0_i32_0 : i32, i32
  }
  func.func @transform_7(%arg0: i32) -> (i32, i32) {
    %c0_i32 = arith.constant 0 : i32
    %c0_i32_0 = arith.constant 0 : i32
    return %arg0, %c0_i32 : i32, i32
  }
  func.func @transform_8(%arg0: i32) -> (i32, i32) {
    %c0_i32 = arith.constant 0 : i32
    %c0_i32_0 = arith.constant 0 : i32
    return %arg0, %c0_i32 : i32, i32
  }
}

</mosaic_0001>

<llo_original>
// kernel: tree_lstm_cell_forward.1
$region0: #{tree_lstm_cell_forward.1}
  #allocation0 [shape = 'u32[]', space=smem, size = 0x4, offset = 0x4, fixed_abs, tag = 'smem constant byte address 0x4 - core index']
  #allocation1 [shape = 'u32[72,128]{1,0:T(1,128)}', space=vmem, size = 0x9000, scoped, tag = 'internal scratch']
  %s0 = inlined_call_operand.vmem [shape: bf16[8,128], index: 0, kind: input, shape index: {}]
  %s1 = inlined_call_operand.vmem [shape: bf16[8,128], index: 1, kind: input, shape index: {}]
  %s2 = inlined_call_operand.vmem [shape: f32[8,128], index: 2, kind: input, shape index: {}]
  %s3 = inlined_call_operand.vmem [shape: f32[8,128], index: 3, kind: input, shape index: {}]
  %s4 = inlined_call_operand.vmem [shape: bf16[128,640], index: 4, kind: input, shape index: {}]
  %s5 = inlined_call_operand.vmem [shape: bf16[128,640], index: 5, kind: input, shape index: {}]
  %s6 = inlined_call_operand.vmem [shape: f32[1,640], index: 6, kind: input, shape index: {}]
  %s7 = inlined_call_operand.vmem [shape: f32[8,128], index: 7, kind: output, shape index: {0}]
  %s8 = inlined_call_operand.vmem [shape: f32[8,128], index: 8, kind: output, shape index: {1}]
  %9 = xla_tuple %s7, %s8
  %s10 = sld [smem:[#allocation0]]
  $region46: #{tree_lstm_cell_forward.1} parent=0
    _
  %s12 = ssub.s32 1, %s10
  %s13 = scalar_select 0, %s12, %s10
  // Predicated region
  $region2: #{tree_lstm_cell_forward.1} parent=0 // pred_check
    _
  $region3: #{tree_lstm_cell_forward.1} parent=0 // pred_check_branch
    %15 = sbr.rel (0) target = $region5
  $region4: #{tree_lstm_cell_forward.1} parent=0 // pred_region
    _
  $region5: #{tree_lstm_cell_forward.1} parent=0 // pred_fallthru
    _
  // Predicated region
  $region6: #{tree_lstm_cell_forward.1} parent=0 // pred_check
    _
  $region7: #{tree_lstm_cell_forward.1} parent=0 // pred_check_branch
    %17 = sbr.rel (0) target = $region9
  $region8: #{tree_lstm_cell_forward.1} parent=0 // pred_region
    _
  $region9: #{tree_lstm_cell_forward.1} parent=0 // pred_fallthru
    _
  // Predicated region
  $region10: #{tree_lstm_cell_forward.1} parent=0 // pred_check
    _
  $region11: #{tree_lstm_cell_forward.1} parent=0 // pred_check_branch
    %19 = sbr.rel (0) target = $region13
  $region12: #{tree_lstm_cell_forward.1} parent=0 // pred_region
    _
  $region13: #{tree_lstm_cell_forward.1} parent=0 // pred_fallthru
    _
  // Predicated region
  $region14: #{tree_lstm_cell_forward.1} parent=0 // pred_check
    _
  $region15: #{tree_lstm_cell_forward.1} parent=0 // pred_check_branch
    %21 = sbr.rel (0) target = $region17
  $region16: #{tree_lstm_cell_forward.1} parent=0 // pred_region
    _
  $region17: #{tree_lstm_cell_forward.1} parent=0 // pred_fallthru
    _
  // Predicated region
  $region18: #{tree_lstm_cell_forward.1} parent=0 // pred_check
    _
  $region19: #{tree_lstm_cell_forward.1} parent=0 // pred_check_branch
    %23 = sbr.rel (0) target = $region21
  $region20: #{tree_lstm_cell_forward.1} parent=0 // pred_region
    _
  $region21: #{tree_lstm_cell_forward.1} parent=0 // pred_fallthru
    _
  // Predicated region
  $region22: #{tree_lstm_cell_forward.1} parent=0 // pred_check
    _
  $region23: #{tree_lstm_cell_forward.1} parent=0 // pred_check_branch
    %25 = sbr.rel (0) target = $region25
  $region24: #{tree_lstm_cell_forward.1} parent=0 // pred_region
    _
  $region25: #{tree_lstm_cell_forward.1} parent=0 // pred_fallthru
    _
  // Predicated region
  $region26: #{tree_lstm_cell_forward.1} parent=0 // pred_check
    _
  $region27: #{tree_lstm_cell_forward.1} parent=0 // pred_check_branch
    %27 = sbr.rel (0) target = $region29
  $region28: #{tree_lstm_cell_forward.1} parent=0 // pred_region
    _
  $region29: #{tree_lstm_cell_forward.1} parent=0 // pred_fallthru
    _
  %v28 = vld [vmem:[%s0] sm:$0xf]
  %v29 = vld [vmem:[%s4] sm:$0xff]
  %v30 = vld [vmem:[%s4 + $0x8] sm:$0xff]
  %v31 = vld [vmem:[%s4 + $0x10] sm:$0xf]
  %v32 = vld [vmem:[%s4 + $0x14] sm:$0xff]
  %v33 = vld [vmem:[%s4 + $0x1c] sm:$0xff]
  %v34 = vld [vmem:[%s4 + $0x24] sm:$0xf]
  %v35 = vld [vmem:[%s4 + $0x28] sm:$0xff]
  %v36 = vld [vmem:[%s4 + $0x30] sm:$0xff]
  %v37 = vld [vmem:[%s4 + $0x38] sm:$0xf]
  %v38 = vld [vmem:[%s4 + $0x3c] sm:$0xff]
  %v39 = vld [vmem:[%s4 + $0x44] sm:$0xff]
  %v40 = vld [vmem:[%s4 + $0x4c] sm:$0xf]
  %v41 = vld [vmem:[%s4 + $0x50] sm:$0xff]
  %v42 = vld [vmem:[%s4 + $0x58] sm:$0xff]
  %v43 = vld [vmem:[%s4 + $0x60] sm:$0xf]
  %v44 = vld [vmem:[%s4 + $0x64] sm:$0xff]
  %v45 = vld [vmem:[%s4 + $0x6c] sm:$0xff]
  %v46 = vld [vmem:[%s4 + $0x74] sm:$0xf]
  %v47 = vld [vmem:[%s4 + $0x78] sm:$0xff]
  %v48 = vld [vmem:[%s4 + $0x80] sm:$0xff]
  %v49 = vld [vmem:[%s4 + $0x88] sm:$0xf]
  %v50 = vld [vmem:[%s4 + $0x8c] sm:$0xff]
  %v51 = vld [vmem:[%s4 + $0x94] sm:$0xff]
  %v52 = vld [vmem:[%s4 + $0x9c] sm:$0xf]
  %v53 = vld [vmem:[%s4 + $0xa0] sm:$0xff]
  %v54 = vld [vmem:[%s4 + $0xa8] sm:$0xff]
  %v55 = vld [vmem:[%s4 + $0xb0] sm:$0xf]
  %v56 = vld [vmem:[%s4 + $0xb4] sm:$0xff]
  %v57 = vld [vmem:[%s4 + $0xbc] sm:$0xff]
  %v58 = vld [vmem:[%s4 + $0xc4] sm:$0xf]
  %v59 = vld [vmem:[%s4 + $0xc8] sm:$0xff]
  %v60 = vld [vmem:[%s4 + $0xd0] sm:$0xff]
  %v61 = vld [vmem:[%s4 + $0xd8] sm:$0xf]
  %v62 = vld [vmem:[%s4 + $0xdc] sm:$0xff]
  %v63 = vld [vmem:[%s4 + $0xe4] sm:$0xff]
  %v64 = vld [vmem:[%s4 + $0xec] sm:$0xf]
  %v65 = vld [vmem:[%s4 + $0xf0] sm:$0xff]
  %v66 = vld [vmem:[%s4 + $0xf8] sm:$0xff]
  %v67 = vld [vmem:[%s4 + $0x100] sm:$0xf]
  %v68 = vld [vmem:[%s4 + $0x104] sm:$0xff]
  %v69 = vld [vmem:[%s4 + $0x10c] sm:$0xff]
  %v70 = vld [vmem:[%s4 + $0x114] sm:$0xf]
  %v71 = vld [vmem:[%s4 + $0x118] sm:$0xff]
  %v72 = vld [vmem:[%s4 + $0x120] sm:$0xff]
  %v73 = vld [vmem:[%s4 + $0x128] sm:$0xf]
  %v74 = vld [vmem:[%s4 + $0x12c] sm:$0xff]
  %v75 = vld [vmem:[%s4 + $0x134] sm:$0xff]
  %v76 = vld [vmem:[%s4 + $0x13c] sm:$0xf]
  %v77 = vld [vmem:[%s1] sm:$0xf]
  %v78 = vld [vmem:[%s5] sm:$0xff]
  %v79 = vld [vmem:[%s5 + $0x8] sm:$0xff]
  %v80 = vld [vmem:[%s5 + $0x10] sm:$0xf]
  %v81 = vld [vmem:[%s5 + $0x14] sm:$0xff]
  %v82 = vld [vmem:[%s5 + $0x1c] sm:$0xff]
  %v83 = vld [vmem:[%s5 + $0x24] sm:$0xf]
  %v84 = vld [vmem:[%s5 + $0x28] sm:$0xff]
  %v85 = vld [vmem:[%s5 + $0x30] sm:$0xff]
  %v86 = vld [vmem:[%s5 + $0x38] sm:$0xf]
  %v87 = vld [vmem:[%s5 + $0x3c] sm:$0xff]
  %v88 = vld [vmem:[%s5 + $0x44] sm:$0xff]
  %v89 = vld [vmem:[%s5 + $0x4c] sm:$0xf]
  %v90 = vld [vmem:[%s5 + $0x50] sm:$0xff]
  %v91 = vld [vmem:[%s5 + $0x58] sm:$0xff]
  %v92 = vld [vmem:[%s5 + $0x60] sm:$0xf]
  %v93 = vld [vmem:[%s5 + $0x64] sm:$0xff]
  %v94 = vld [vmem:[%s5 + $0x6c] sm:$0xff]
  %v95 = vld [vmem:[%s5 + $0x74] sm:$0xf]
  %v96 = vld [vmem:[%s5 + $0x78] sm:$0xff]
  %v97 = vld [vmem:[%s5 + $0x80] sm:$0xff]
  %v98 = vld [vmem:[%s5 + $0x88] sm:$0xf]
  %v99 = vld [vmem:[%s5 + $0x8c] sm:$0xff]
  %v100 = vld [vmem:[%s5 + $0x94] sm:$0xff]
  %v101 = vld [vmem:[%s5 + $0x9c] sm:$0xf]
  %v102 = vld [vmem:[%s5 + $0xa0] sm:$0xff]
  %v103 = vld [vmem:[%s5 + $0xa8] sm:$0xff]
  %v104 = vld [vmem:[%s5 + $0xb0] sm:$0xf]
  %v105 = vld [vmem:[%s5 + $0xb4] sm:$0xff]
  %v106 = vld [vmem:[%s5 + $0xbc] sm:$0xff]
  %v107 = vld [vmem:[%s5 + $0xc4] sm:$0xf]
  %v108 = vld [vmem:[%s5 + $0xc8] sm:$0xff]
  %v109 = vld [vmem:[%s5 + $0xd0] sm:$0xff]
  %v110 = vld [vmem:[%s5 + $0xd8] sm:$0xf]
  %v111 = vld [vmem:[%s5 + $0xdc] sm:$0xff]
  %v112 = vld [vmem:[%s5 + $0xe4] sm:$0xff]
  %v113 = vld [vmem:[%s5 + $0xec] sm:$0xf]
  %v114 = vld [vmem:[%s5 + $0xf0] sm:$0xff]
  %v115 = vld [vmem:[%s5 + $0xf8] sm:$0xff]
  %v116 = vld [vmem:[%s5 + $0x100] sm:$0xf]
  %v117 = vld [vmem:[%s5 + $0x104] sm:$0xff]
  %v118 = vld [vmem:[%s5 + $0x10c] sm:$0xff]
  %v119 = vld [vmem:[%s5 + $0x114] sm:$0xf]
  %v120 = vld [vmem:[%s5 + $0x118] sm:$0xff]
  %v121 = vld [vmem:[%s5 + $0x120] sm:$0xff]
  %v122 = vld [vmem:[%s5 + $0x128] sm:$0xf]
  %v123 = vld [vmem:[%s5 + $0x12c] sm:$0xff]
  %v124 = vld [vmem:[%s5 + $0x134] sm:$0xff]
  %v125 = vld [vmem:[%s5 + $0x13c] sm:$0xf]
  %v174 = vunpack.c.l.b16 %v78
  %v175 = vunpack.c.h.b16 %v78
  %v176 = vunpack.c.l.b16 %v79
  %v177 = vunpack.c.h.b16 %v79
  %v178 = vunpack.c.l.b16 %v80
  %v179 = vunpack.c.l.b16 %v81
  %v180 = vunpack.c.h.b16 %v81
  %v181 = vunpack.c.l.b16 %v82
  %v182 = vunpack.c.h.b16 %v82
  %v183 = vunpack.c.l.b16 %v83
  %v184 = vunpack.c.l.b16 %v84
  %v185 = vunpack.c.h.b16 %v84
  %v186 = vunpack.c.l.b16 %v85
  %v187 = vunpack.c.h.b16 %v85
  %v188 = vunpack.c.l.b16 %v86
  %v189 = vunpack.c.l.b16 %v87
  %v190 = vunpack.c.h.b16 %v87
  %v191 = vunpack.c.l.b16 %v88
  %v192 = vunpack.c.h.b16 %v88
  %v193 = vunpack.c.l.b16 %v89
  %v194 = vunpack.c.l.b16 %v90
  %v195 = vunpack.c.h.b16 %v90
  %v196 = vunpack.c.l.b16 %v91
  %v197 = vunpack.c.h.b16 %v91
  %v198 = vunpack.c.l.b16 %v92
  %v199 = vunpack.c.l.b16 %v93
  %v200 = vunpack.c.h.b16 %v93
  %v201 = vunpack.c.l.b16 %v94
  %v202 = vunpack.c.h.b16 %v94
  %v203 = vunpack.c.l.b16 %v95
  %v204 = vunpack.c.l.b16 %v96
  %v205 = vunpack.c.h.b16 %v96
  %v206 = vunpack.c.l.b16 %v97
  %v207 = vunpack.c.h.b16 %v97
  %v208 = vunpack.c.l.b16 %v98
  %v209 = vunpack.c.l.b16 %v99
  %v210 = vunpack.c.h.b16 %v99
  %v211 = vunpack.c.l.b16 %v100
  %v212 = vunpack.c.h.b16 %v100
  %v213 = vunpack.c.l.b16 %v101
  %v214 = vunpack.c.l.b16 %v102
  %v215 = vunpack.c.h.b16 %v102
  %v216 = vunpack.c.l.b16 %v103
  %v217 = vunpack.c.h.b16 %v103
  %v218 = vunpack.c.l.b16 %v104
  %v219 = vunpack.c.l.b16 %v105
  %v220 = vunpack.c.h.b16 %v105
  %v221 = vunpack.c.l.b16 %v106
  %v222 = vunpack.c.h.b16 %v106
  %v223 = vunpack.c.l.b16 %v107
  %v224 = vunpack.c.l.b16 %v108
  %v225 = vunpack.c.h.b16 %v108
  %v226 = vunpack.c.l.b16 %v109
  %v227 = vunpack.c.h.b16 %v109
  %v228 = vunpack.c.l.b16 %v110
  %v229 = vunpack.c.l.b16 %v111
  %v230 = vunpack.c.h.b16 %v111
  %v231 = vunpack.c.l.b16 %v112
  %v232 = vunpack.c.h.b16 %v112
  %v233 = vunpack.c.l.b16 %v113
  %v234 = vunpack.c.l.b16 %v114
  %v235 = vunpack.c.h.b16 %v114
  %v236 = vunpack.c.l.b16 %v115
  %v237 = vunpack.c.h.b16 %v115
  %v238 = vunpack.c.l.b16 %v116
  %v239 = vunpack.c.l.b16 %v117
  %v240 = vunpack.c.h.b16 %v117
  %v241 = vunpack.c.l.b16 %v118
  %v242 = vunpack.c.h.b16 %v118
  %v243 = vunpack.c.l.b16 %v119
  %v244 = vunpack.c.l.b16 %v120
  %v245 = vunpack.c.h.b16 %v120
  %v246 = vunpack.c.l.b16 %v121
  %v247 = vunpack.c.h.b16 %v121
  %v248 = vunpack.c.l.b16 %v122
  %v249 = vunpack.c.l.b16 %v123
  %v250 = vunpack.c.h.b16 %v123
  %v251 = vunpack.c.l.b16 %v124
  %v252 = vunpack.c.h.b16 %v124
  %v253 = vunpack.c.l.b16 %v125
  %v254 = vpack.c.b16 %v179, %v174
  %v255 = vpack.c.b16 %v180, %v175
  %v256 = vpack.c.b16 %v181, %v176
  %v257 = vpack.c.b16 %v182, %v177
  %v258 = vpack.c.b16 %v183, %v178
  %v259 = vpack.c.b16 %v189, %v184
  %v260 = vpack.c.b16 %v190, %v185
  %v261 = vpack.c.b16 %v191, %v186
  %v262 = vpack.c.b16 %v192, %v187
  %v263 = vpack.c.b16 %v193, %v188
  %v264 = vpack.c.b16 %v199, %v194
  %v265 = vpack.c.b16 %v200, %v195
  %v266 = vpack.c.b16 %v201, %v196
  %v267 = vpack.c.b16 %v202, %v197
  %v268 = vpack.c.b16 %v203, %v198
  %v269 = vpack.c.b16 %v209, %v204
  %v270 = vpack.c.b16 %v210, %v205
  %v271 = vpack.c.b16 %v211, %v206
  %v272 = vpack.c.b16 %v212, %v207
  %v273 = vpack.c.b16 %v213, %v208
  %v274 = vpack.c.b16 %v219, %v214
  %v275 = vpack.c.b16 %v220, %v215
  %v276 = vpack.c.b16 %v221, %v216
  %v277 = vpack.c.b16 %v222, %v217
  %v278 = vpack.c.b16 %v223, %v218
  %v279 = vpack.c.b16 %v229, %v224
  %v280 = vpack.c.b16 %v230, %v225
  %v281 = vpack.c.b16 %v231, %v226
  %v282 = vpack.c.b16 %v232, %v227
  %v283 = vpack.c.b16 %v233, %v228
  %v284 = vpack.c.b16 %v239, %v234
  %v285 = vpack.c.b16 %v240, %v235
  %v286 = vpack.c.b16 %v241, %v236
  %v287 = vpack.c.b16 %v242, %v237
  %v288 = vpack.c.b16 %v243, %v238
  %v289 = vpack.c.b16 %v249, %v244
  %v290 = vpack.c.b16 %v250, %v245
  %v291 = vpack.c.b16 %v251, %v246
  %v292 = vpack.c.b16 %v252, %v247
  %v293 = vpack.c.b16 %v253, %v248
  %334 = vmatpush.bf16.msra.mxu0 %v289
  %335 = vmatpush.bf16.msra.mxu0 %v284
  %336 = vmatpush.bf16.msra.mxu0 %v279
  %337 = vmatpush.bf16.msra.mxu0 %v274
  %338 = vmatpush.bf16.msra.mxu0 %v269
  %339 = vmatpush.bf16.msra.mxu0 %v264
  %340 = vmatpush.bf16.msra.mxu0 %v259
  %341 = vmatpush.bf16.msra.mxu0 %v254
  %342 = vmatmul.bf16.gmra.mxu0 %v77
  %v343 = vpop.f32.mrf.mxu0
  %v344 = vadd.f32 0.0, %v343
  %v345 = vpop.f32.mrf.mxu0
  %346 = vdwg.mxu0
  %347 = vmatpush.bf16.msra.mxu0 %v290
  %348 = vmatpush.bf16.msra.mxu0 %v285
  %349 = vmatpush.bf16.msra.mxu0 %v280
  %350 = vmatpush.bf16.msra.mxu0 %v275
  %351 = vmatpush.bf16.msra.mxu0 %v270
  %352 = vmatpush.bf16.msra.mxu0 %v265
  %353 = vmatpush.bf16.msra.mxu0 %v260
  %354 = vmatpush.bf16.msra.mxu0 %v255
  %355 = vmatmul.bf16.gmra.mxu0 %v77
  %v356 = vpop.f32.mrf.mxu0
  %v357 = vadd.f32 0.0, %v356
  %v358 = vpop.f32.mrf.mxu0
  %359 = vdwg.mxu0
  %360 = vmatpush.bf16.msra.mxu0 %v291
  %361 = vmatpush.bf16.msra.mxu0 %v286
  %362 = vmatpush.bf16.msra.mxu0 %v281
  %363 = vmatpush.bf16.msra.mxu0 %v276
  %364 = vmatpush.bf16.msra.mxu0 %v271
  %365 = vmatpush.bf16.msra.mxu0 %v266
  %366 = vmatpush.bf16.msra.mxu0 %v261
  %367 = vmatpush.bf16.msra.mxu0 %v256
  %368 = vmatmul.bf16.gmra.mxu0 %v77
  %v369 = vpop.f32.mrf.mxu0
  %v370 = vadd.f32 0.0, %v369
  %v371 = vpop.f32.mrf.mxu0
  %372 = vdwg.mxu0
  %373 = vmatpush.bf16.msra.mxu0 %v292
  %374 = vmatpush.bf16.msra.mxu0 %v287
  %375 = vmatpush.bf16.msra.mxu0 %v282
  %376 = vmatpush.bf16.msra.mxu0 %v277
  %377 = vmatpush.bf16.msra.mxu0 %v272
  %378 = vmatpush.bf16.msra.mxu0 %v267
  %379 = vmatpush.bf16.msra.mxu0 %v262
  %380 = vmatpush.bf16.msra.mxu0 %v257
  %381 = vmatmul.bf16.gmra.mxu0 %v77
  %v382 = vpop.f32.mrf.mxu0
  %v383 = vadd.f32 0.0, %v382
  %v384 = vpop.f32.mrf.mxu0
  %385 = vdwg.mxu0
  %386 = vmatpush.bf16.msra.mxu0 %v293
  %387 = vmatpush.bf16.msra.mxu0 %v288
  %388 = vmatpush.bf16.msra.mxu0 %v283
  %389 = vmatpush.bf16.msra.mxu0 %v278
  %390 = vmatpush.bf16.msra.mxu0 %v273
  %391 = vmatpush.bf16.msra.mxu0 %v268
  %392 = vmatpush.bf16.msra.mxu0 %v263
  %393 = vmatpush.bf16.msra.mxu0 %v258
  %394 = vmatmul.bf16.gmra.mxu0 %v77
  %v395 = vpop.f32.mrf.mxu0
  %v396 = vadd.f32 0.0, %v395
  %v397 = vpop.f32.mrf.mxu0
  %398 = vdwg.mxu0
  %v447 = vunpack.c.l.b16 %v29
  %v448 = vunpack.c.h.b16 %v29
  %v449 = vunpack.c.l.b16 %v30
  %v450 = vunpack.c.h.b16 %v30
  %v451 = vunpack.c.l.b16 %v31
  %v452 = vunpack.c.l.b16 %v32
  %v453 = vunpack.c.h.b16 %v32
  %v454 = vunpack.c.l.b16 %v33
  %v455 = vunpack.c.h.b16 %v33
  %v456 = vunpack.c.l.b16 %v34
  %v457 = vunpack.c.l.b16 %v35
  %v458 = vunpack.c.h.b16 %v35
  %v459 = vunpack.c.l.b16 %v36
  %v460 = vunpack.c.h.b16 %v36
  %v461 = vunpack.c.l.b16 %v37
  %v462 = vunpack.c.l.b16 %v38
  %v463 = vunpack.c.h.b16 %v38
  %v464 = vunpack.c.l.b16 %v39
  %v465 = vunpack.c.h.b16 %v39
  %v466 = vunpack.c.l.b16 %v40
  %v467 = vunpack.c.l.b16 %v41
  %v468 = vunpack.c.h.b16 %v41
  %v469 = vunpack.c.l.b16 %v42
  %v470 = vunpack.c.h.b16 %v42
  %v471 = vunpack.c.l.b16 %v43
  %v472 = vunpack.c.l.b16 %v44
  %v473 = vunpack.c.h.b16 %v44
  %v474 = vunpack.c.l.b16 %v45
  %v475 = vunpack.c.h.b16 %v45
  %v476 = vunpack.c.l.b16 %v46
  %v477 = vunpack.c.l.b16 %v47
  %v478 = vunpack.c.h.b16 %v47
  %v479 = vunpack.c.l.b16 %v48
  %v480 = vunpack.c.h.b16 %v48
  %v481 = vunpack.c.l.b16 %v49
  %v482 = vunpack.c.l.b16 %v50
  %v483 = vunpack.c.h.b16 %v50
  %v484 = vunpack.c.l.b16 %v51
  %v485 = vunpack.c.h.b16 %v51
  %v486 = vunpack.c.l.b16 %v52
  %v487 = vunpack.c.l.b16 %v53
  %v488 = vunpack.c.h.b16 %v53
  %v489 = vunpack.c.l.b16 %v54
  %v490 = vunpack.c.h.b16 %v54
  %v491 = vunpack.c.l.b16 %v55
  %v492 = vunpack.c.l.b16 %v56
  %v493 = vunpack.c.h.b16 %v56
  %v494 = vunpack.c.l.b16 %v57
  %v495 = vunpack.c.h.b16 %v57
  %v496 = vunpack.c.l.b16 %v58
  %v497 = vunpack.c.l.b16 %v59
  %v498 = vunpack.c.h.b16 %v59
  %v499 = vunpack.c.l.b16 %v60
  %v500 = vunpack.c.h.b16 %v60
  %v501 = vunpack.c.l.b16 %v61
  %v502 = vunpack.c.l.b16 %v62
  %v503 = vunpack.c.h.b16 %v62
  %v504 = vunpack.c.l.b16 %v63
  %v505 = vunpack.c.h.b16 %v63
  %v506 = vunpack.c.l.b16 %v64
  %v507 = vunpack.c.l.b16 %v65
  %v508 = vunpack.c.h.b16 %v65
  %v509 = vunpack.c.l.b16 %v66
  %v510 = vunpack.c.h.b16 %v66
  %v511 = vunpack.c.l.b16 %v67
  %v512 = vunpack.c.l.b16 %v68
  %v513 = vunpack.c.h.b16 %v68
  %v514 = vunpack.c.l.b16 %v69
  %v515 = vunpack.c.h.b16 %v69
  %v516 = vunpack.c.l.b16 %v70
  %v517 = vunpack.c.l.b16 %v71
  %v518 = vunpack.c.h.b16 %v71
  %v519 = vunpack.c.l.b16 %v72
  %v520 = vunpack.c.h.b16 %v72
  %v521 = vunpack.c.l.b16 %v73
  %v522 = vunpack.c.l.b16 %v74
  %v523 = vunpack.c.h.b16 %v74
  %v524 = vunpack.c.l.b16 %v75
  %v525 = vunpack.c.h.b16 %v75
  %v526 = vunpack.c.l.b16 %v76
  %v527 = vpack.c.b16 %v452, %v447
  %v528 = vpack.c.b16 %v453, %v448
  %v529 = vpack.c.b16 %v454, %v449
  %v530 = vpack.c.b16 %v455, %v450
  %v531 = vpack.c.b16 %v456, %v451
  %v532 = vpack.c.b16 %v462, %v457
  %v533 = vpack.c.b16 %v463, %v458
  %v534 = vpack.c.b16 %v464, %v459
  %v535 = vpack.c.b16 %v465, %v460
  %v536 = vpack.c.b16 %v466, %v461
  %v537 = vpack.c.b16 %v472, %v467
  %v538 = vpack.c.b16 %v473, %v468
  %v539 = vpack.c.b16 %v474, %v469
  %v540 = vpack.c.b16 %v475, %v470
  %v541 = vpack.c.b16 %v476, %v471
  %v542 = vpack.c.b16 %v482, %v477
  %v543 = vpack.c.b16 %v483, %v478
  %v544 = vpack.c.b16 %v484, %v479
  %v545 = vpack.c.b16 %v485, %v480
  %v546 = vpack.c.b16 %v486, %v481
  %v547 = vpack.c.b16 %v492, %v487
  %v548 = vpack.c.b16 %v493, %v488
  %v549 = vpack.c.b16 %v494, %v489
  %v550 = vpack.c.b16 %v495, %v490
  %v551 = vpack.c.b16 %v496, %v491
  %v552 = vpack.c.b16 %v502, %v497
  %v553 = vpack.c.b16 %v503, %v498
  %v554 = vpack.c.b16 %v504, %v499
  %v555 = vpack.c.b16 %v505, %v500
  %v556 = vpack.c.b16 %v506, %v501
  %v557 = vpack.c.b16 %v512, %v507
  %v558 = vpack.c.b16 %v513, %v508
  %v559 = vpack.c.b16 %v514, %v509
  %v560 = vpack.c.b16 %v515, %v510
  %v561 = vpack.c.b16 %v516, %v511
  %v562 = vpack.c.b16 %v522, %v517
  %v563 = vpack.c.b16 %v523, %v518
  %v564 = vpack.c.b16 %v524, %v519
  %v565 = vpack.c.b16 %v525, %v520
  %v566 = vpack.c.b16 %v526, %v521
  %607 = vmatpush.bf16.msra.mxu0 %v562
  %608 = vmatpush.bf16.msra.mxu0 %v557
  %609 = vmatpush.bf16.msra.mxu0 %v552
  %610 = vmatpush.bf16.msra.mxu0 %v547
  %611 = vmatpush.bf16.msra.mxu0 %v542
  %612 = vmatpush.bf16.msra.mxu0 %v537
  %613 = vmatpush.bf16.msra.mxu0 %v532
  %614 = vmatpush.bf16.msra.mxu0 %v527
  %615 = vmatmul.bf16.gmra.mxu0 %v28
  %v616 = vpop.f32.mrf.mxu0
  %v617 = vadd.f32 %v344, %v616
  %v618 = vpop.f32.mrf.mxu0
  %619 = vdwg.mxu0
  %620 = vmatpush.bf16.msra.mxu0 %v563
  %621 = vmatpush.bf16.msra.mxu0 %v558
  %622 = vmatpush.bf16.msra.mxu0 %v553
  %623 = vmatpush.bf16.msra.mxu0 %v548
  %624 = vmatpush.bf16.msra.mxu0 %v543
  %625 = vmatpush.bf16.msra.mxu0 %v538
  %626 = vmatpush.bf16.msra.mxu0 %v533
  %627 = vmatpush.bf16.msra.mxu0 %v528
  %628 = vmatmul.bf16.gmra.mxu0 %v28
  %v629 = vpop.f32.mrf.mxu0
  %v630 = vadd.f32 %v357, %v629
  %v631 = vpop.f32.mrf.mxu0
  %632 = vdwg.mxu0
  %633 = vmatpush.bf16.msra.mxu0 %v564
  %634 = vmatpush.bf16.msra.mxu0 %v559
  %635 = vmatpush.bf16.msra.mxu0 %v554
  %636 = vmatpush.bf16.msra.mxu0 %v549
  %637 = vmatpush.bf16.msra.mxu0 %v544
  %638 = vmatpush.bf16.msra.mxu0 %v539
  %639 = vmatpush.bf16.msra.mxu0 %v534
  %640 = vmatpush.bf16.msra.mxu0 %v529
  %641 = vmatmul.bf16.gmra.mxu0 %v28
  %v642 = vpop.f32.mrf.mxu0
  %v643 = vadd.f32 %v370, %v642
  %v644 = vpop.f32.mrf.mxu0
  %645 = vdwg.mxu0
  %646 = vmatpush.bf16.msra.mxu0 %v565
  %647 = vmatpush.bf16.msra.mxu0 %v560
  %648 = vmatpush.bf16.msra.mxu0 %v555
  %649 = vmatpush.bf16.msra.mxu0 %v550
  %650 = vmatpush.bf16.msra.mxu0 %v545
  %651 = vmatpush.bf16.msra.mxu0 %v540
  %652 = vmatpush.bf16.msra.mxu0 %v535
  %653 = vmatpush.bf16.msra.mxu0 %v530
  %654 = vmatmul.bf16.gmra.mxu0 %v28
  %v655 = vpop.f32.mrf.mxu0
  %v656 = vadd.f32 %v383, %v655
  %v657 = vpop.f32.mrf.mxu0
  %658 = vdwg.mxu0
  %659 = vmatpush.bf16.msra.mxu0 %v566
  %660 = vmatpush.bf16.msra.mxu0 %v561
  %661 = vmatpush.bf16.msra.mxu0 %v556
  %662 = vmatpush.bf16.msra.mxu0 %v551
  %663 = vmatpush.bf16.msra.mxu0 %v546
  %664 = vmatpush.bf16.msra.mxu0 %v541
  %665 = vmatpush.bf16.msra.mxu0 %v536
  %666 = vmatpush.bf16.msra.mxu0 %v531
  %667 = vmatmul.bf16.gmra.mxu0 %v28
  %v668 = vpop.f32.mrf.mxu0
  %v669 = vadd.f32 %v396, %v668
  %v670 = vpop.f32.mrf.mxu0
  %671 = vdwg.mxu0
  %v672 = vld [vmem:[%s6] sm:$0x1f]
  %v674 = vperm.slane %v672, 0
  %v675 = vperm.slane %v672, 1
  %v676 = vperm.slane %v672, 2
  %v677 = vperm.slane %v672, 3
  %v678 = vperm.slane %v672, 4
  %v684 = vadd.f32 %v617, %v674
  %v685 = vadd.f32 %v630, %v675
  %v686 = vadd.f32 %v643, %v676
  %v687 = vadd.f32 %v656, %v677
  %v688 = vadd.f32 %v669, %v678
  %v689 = vmul.f32 %v684, 0.5
  %v690 = vtanh.pop %v689
  %v691 = vadd.f32 %v690, 1.0
  %v692 = vmul.f32 %v691, 0.5
  %v693 = vtanh.pop %v687
  %v694 = vmul.f32 %v692, %v693
  %v695 = vmul.f32 %v685, 0.5
  %v696 = vtanh.pop %v695
  %v697 = vadd.f32 %v696, 1.0
  %v698 = vmul.f32 %v697, 0.5
  %v699 = vld [vmem:[%s2] sm:$0xff]
  %v700 = vmul.f32 %v698, %v699
  %v701 = vadd.f32 %v694, %v700
  %v702 = vmul.f32 %v686, 0.5
  %v703 = vtanh.pop %v702
  %v704 = vadd.f32 %v703, 1.0
  %v705 = vmul.f32 %v704, 0.5
  %v706 = vld [vmem:[%s3] sm:$0xff]
  %v707 = vmul.f32 %v705, %v706
  %v708 = vadd.f32 %v701, %v707
  %v709 = vmul.f32 %v688, 0.5
  %v710 = vtanh.pop %v709
  %v711 = vadd.f32 %v710, 1.0
  %v712 = vmul.f32 %v711, 0.5
  %v713 = vtanh.pop %v708
  %v714 = vmul.f32 %v712, %v713
  %715 = vst [vmem:[%s8] sm:$0xff] %v708
  %716 = vst [vmem:[%s7] sm:$0xff] %v714
  // Predicated region
  $region30: #{tree_lstm_cell_forward.1} parent=0 // pred_check
    _
  $region31: #{tree_lstm_cell_forward.1} parent=0 // pred_check_branch
    %718 = sbr.rel (0) target = $region33
  $region32: #{tree_lstm_cell_forward.1} parent=0 // pred_region
    _
  $region33: #{tree_lstm_cell_forward.1} parent=0 // pred_fallthru
    _
  // Predicated region
  $region34: #{tree_lstm_cell_forward.1} parent=0 // pred_check
    _
  $region35: #{tree_lstm_cell_forward.1} parent=0 // pred_check_branch
    %720 = sbr.rel (0) target = $region37
  $region36: #{tree_lstm_cell_forward.1} parent=0 // pred_region
    _
  $region37: #{tree_lstm_cell_forward.1} parent=0 // pred_fallthru
    _
  // Predicated region
  $region38: #{tree_lstm_cell_forward.1} parent=0 // pred_check
    _
  $region39: #{tree_lstm_cell_forward.1} parent=0 // pred_check_branch
    %722 = sbr.rel (0) target = $region41
  $region40: #{tree_lstm_cell_forward.1} parent=0 // pred_region
    _
  $region41: #{tree_lstm_cell_forward.1} parent=0 // pred_fallthru
    _
  // Predicated region
  $region42: #{tree_lstm_cell_forward.1} parent=0 // pred_check
    _
  $region43: #{tree_lstm_cell_forward.1} parent=0 // pred_check_branch
    %724 = sbr.rel (0) target = $region45
  $region44: #{tree_lstm_cell_forward.1} parent=0 // pred_region
    _
  $region45: #{tree_lstm_cell_forward.1} parent=0 // pred_fallthru
    _

</llo_original>
